<compile_context>
chip_gen: v6e
topology: v6e:2x2x1
jax: 0.10.0
libtpu: 0.0.40
codegen_flags: <defaults>
</compile_context>

<pallas_src>
import numpy as np
import jax
import jax.numpy as jnp
from jax import lax
from jax.experimental import pallas as pl
from jax.experimental.pallas import tpu as pltpu

# ---------------- problem sizes (small, deterministic) ----------------
B, C_IN, H, W = 2, 4, 16, 16
C_OUT = 8
STRIDE = 2
H_OUT, W_OUT = H // STRIDE, W // STRIDE
NP = B * H_OUT * W_OUT              # 128 flattened output positions (lane axis)
K1 = 9 * C_IN + 1                   # conv1 im2col depth + ones row (carries b1/bd)
K1P = 40                            # K1 zero-padded to a multiple of 8 sublanes
K2 = 9 * C_OUT + 1                  # conv2 im2col depth + ones row (carries b2)
LEAKY_SLOPE = 0.01                  # nn.LeakyReLU default

# packed weight-slab row layout
ROW_WC, ROW_W2, ROW_G, ROW_MASK = 0, 16, 24, 32
SLAB_ROWS = ROW_MASK + 9 * C_OUT    # 104 rows (multiple of 8), 128 lanes
ROW_ONES = ROW_MASK + 4 * C_OUT     # centre-tap mask rows == all ones

# conv2 tap offsets in flattened-position space (row-major i*Wo + j per image)
OFFSETS = tuple((dh - 1) * W_OUT + (dw - 1) for dh in range(3) for dw in range(3))

assert NP == 128, "this test-size kernel assumes one 128-lane position tile"
# TODO(synk): at production sizes, give the grid a real 'parallel' axis over
# position tiles (>=256 lanes/step to fill v6e/v7x MXU, 2 TCs on v7x), form
# conv1's im2col in-kernel with strided reads instead of in the wrapper (avoids
# the 9x HBM expansion), and budget double-buffered VMEM against v7x's 64 MiB.


# ---------------- Pallas kernel: whole batch in one grid step ----------------
def _resblock_kernel(x1t_ref, wb_ref, out_ref):
    # ---- conv1 (3x3, s=2, p=1) + bias AND 1x1 s=2 downsample + bias:
    #      one fused matmul (16, 40) @ (40, 128); biases ride the ones row ----
    wc = wb_ref[ROW_WC:ROW_WC + 2 * C_OUT, 0:K1P]                      # (16, 40)
    t = jnp.dot(wc, x1t_ref[...], preferred_element_type=jnp.float32)  # (16, 128)
    out1_t = t[0:C_OUT, :]                                             # conv1 path
    ident_t = t[C_OUT:2 * C_OUT, :]                                    # skip path

    # ---- LeakyReLU ----
    a_t = jnp.where(out1_t >= 0, out1_t, LEAKY_SLOPE * out1_t)         # (8, 128)

    # ---- conv2 (3x3, s=1, p=1): taps = lane rolls (XLU slot) * precomputed
    #      boundary masks (plain VPU multiply); one (8,73)@(73,128) matmul,
    #      b2 folded via the ones row ----
    mask = wb_ref[ROW_MASK:ROW_MASK + 9 * C_OUT, :]                    # (72, 128)
    ones_row = wb_ref[ROW_ONES:ROW_ONES + 1, :]                        # (1, 128) of 1s

    taps = []
    for ti, off in enumerate(OFFSETS):
        r = a_t if off == 0 else pltpu.roll(a_t, shift=(-off) % NP, axis=1)
        taps.append(r * mask[ti * C_OUT:(ti + 1) * C_OUT, :])
    col2_t = jnp.concatenate(taps + [ones_row], axis=0)                # (73, 128)

    w2e = wb_ref[ROW_W2:ROW_W2 + C_OUT, 0:K2]                          # (8, 73) [w2|b2]
    out2_t = jnp.dot(w2e, col2_t, preferred_element_type=jnp.float32)  # (8, 128)

    # ---- GDN: y = x * rsqrt(beta + gamma @ x^2); beta rides the ones row ----
    ge = wb_ref[ROW_G:ROW_G + C_OUT, 0:C_OUT + 1]                      # (8, 9) [gamma|beta]
    sq_ext = jnp.concatenate([out2_t * out2_t, ones_row], axis=0)      # (9, 128)
    norm_t = jnp.dot(ge, sq_ext, preferred_element_type=jnp.float32)   # (8, 128)
    y_t = out2_t * lax.rsqrt(norm_t)                                   # rsqrt -> EUP

    # ---- residual add; single full (8, 128) unmasked lane-dense store ----
    out_ref[...] = y_t + ident_t


# ---------------- wrapper: im2col / weight packing + pallas_call ----------------
def _build_kernel_inputs(x_nchw, params):
    w1, b1, w2, b2, gamma, beta, wd, bd = params

    # conv1 im2col (stride 2, pad 1), transposed & sublane-padded:
    #   rows = tap*C_IN + ci, then one ones row (carries biases), then zero pad
    #   cols = b*Ho*Wo + i*Wo + j
    x_pad = jnp.pad(x_nchw, ((0, 0), (0, 0), (1, 1), (1, 1)))
    taps = jnp.stack(
        [x_pad[:, :, kh:kh + STRIDE * H_OUT:STRIDE, kw:kw + STRIDE * W_OUT:STRIDE]
         for kh in range(3) for kw in range(3)], axis=0)               # (9,B,C_IN,Ho,Wo)
    x1t = jnp.transpose(taps, (0, 2, 1, 3, 4)).reshape(9 * C_IN, NP)
    x1t = jnp.concatenate(
        [x1t, jnp.ones((1, NP), jnp.float32),
         jnp.zeros((K1P - K1, NP), jnp.float32)], axis=0)              # (40, 128)

    # ---- packed weight/constant slab (104, 128): one input DMA ----
    # fused conv1 + 1x1-downsample weights; biases in the ones-row column.
    w1_flat = jnp.transpose(w1, (3, 0, 1, 2)).reshape(C_OUT, 9 * C_IN)
    wd_flat = jnp.zeros((C_OUT, 9 * C_IN), jnp.float32)
    # stride-2 1x1 skip conv samples exactly the centre tap (kh=kw=1) of conv1's im2col
    wd_flat = wd_flat.at[:, 4 * C_IN:5 * C_IN].set(wd.T)
    wc = jnp.concatenate(
        [jnp.concatenate([w1_flat, b1.reshape(C_OUT, 1)], axis=1),
         jnp.concatenate([wd_flat, bd.reshape(C_OUT, 1)], axis=1)], axis=0)   # (16, 37)

    # conv2 weights [co, tap*C_OUT + ci] with b2 folded as an extra column.
    w2_flat = jnp.transpose(w2, (3, 0, 1, 2)).reshape(C_OUT, 9 * C_OUT)
    w2e = jnp.concatenate([w2_flat, b2.reshape(C_OUT, 1)], axis=1)            # (8, 73)

    # GDN gamma [co, ci] with beta folded as an extra column.
    ge = jnp.concatenate([gamma, beta.reshape(C_OUT, 1)], axis=1)             # (8, 9)

    # per-tap boundary masks for the rolled conv2 taps (data-independent
    # constants, pre-broadcast to C_OUT sublanes -> plain multiply in-kernel).
    ii, jj = np.divmod(np.arange(H_OUT * W_OUT), W_OUT)
    mask_np = np.zeros((9 * C_OUT, NP), np.float32)
    for ti, (dh, dw) in enumerate((a, b) for a in (-1, 0, 1) for b in (-1, 0, 1)):
        v = ((ii + dh >= 0) & (ii + dh < H_OUT) &
             (jj + dw >= 0) & (jj + dw < W_OUT)).astype(np.float32)
        mask_np[ti * C_OUT:(ti + 1) * C_OUT, :] = np.tile(v, B)[None, :]

    slab = jnp.zeros((SLAB_ROWS, NP), jnp.float32)
    slab = slab.at[ROW_WC:ROW_WC + 2 * C_OUT, 0:K1].set(wc)
    slab = slab.at[ROW_W2:ROW_W2 + C_OUT, 0:K2].set(w2e)
    slab = slab.at[ROW_G:ROW_G + C_OUT, 0:C_OUT + 1].set(ge)
    slab = slab.at[ROW_MASK:ROW_MASK + 9 * C_OUT, :].set(jnp.asarray(mask_np))
    return x1t, slab


@jax.jit
def residual_block_with_stride(x_nchw, params):
    """x_nchw: (B, C_IN, H, W) float32 -> (B, C_OUT, H_OUT, W_OUT) float32."""
    x1t, slab = _build_kernel_inputs(x_nchw, params)

    full2d = lambda shape: pl.BlockSpec(shape, lambda i: (0, 0))

    out_t = pl.pallas_call(
        _resblock_kernel,
        out_shape=jax.ShapeDtypeStruct((C_OUT, NP), jnp.float32),
        grid_spec=pltpu.PrefetchScalarGridSpec(
            num_scalar_prefetch=0,
            grid=(1,),                            # whole batch in one step
            in_specs=[
                full2d((K1P, NP)),                # x1t  (40, 128)
                full2d((SLAB_ROWS, NP)),          # slab (104, 128)
            ],
            out_specs=full2d((C_OUT, NP)),        # (8, 128): one unmasked vreg
        ),
        compiler_params=pltpu.CompilerParams(dimension_semantics=("parallel",)),
    )(x1t, slab)

    # (C_OUT, B*Ho*Wo) -> NCHW
    return jnp.transpose(out_t.reshape(C_OUT, B, H_OUT, W_OUT), (1, 0, 2, 3))


# ---------------- pure-JAX reference (for correctness check) ----------------
def _ref_forward(x_nchw, params):
    w1, b1, w2, b2, gamma, beta, wd, bd = params
    dn = ("NCHW", "HWIO", "NCHW")

    out = lax.conv_general_dilated(x_nchw, w1, (STRIDE, STRIDE),
                                   ((1, 1), (1, 1)), dimension_numbers=dn)
    out = out + b1[None, :, None, None]
    out = jnp.where(out >= 0, out, LEAKY_SLOPE * out)

    out = lax.conv_general_dilated(out, w2, (1, 1),
                                   ((1, 1), (1, 1)), dimension_numbers=dn)
    out = out + b2[None, :, None, None]

    gamma_hwio = jnp.transpose(gamma).reshape(1, 1, C_OUT, C_OUT)   # [ci, co]
    norm = lax.conv_general_dilated(out * out, gamma_hwio, (1, 1),
                                    ((0, 0), (0, 0)), dimension_numbers=dn)
    norm = norm + beta[None, :, None, None]
    gdn = out * lax.rsqrt(norm)

    wd_hwio = wd.reshape(1, 1, C_IN, C_OUT)
    ident = lax.conv_general_dilated(x_nchw, wd_hwio, (STRIDE, STRIDE),
                                     ((0, 0), (0, 0)), dimension_numbers=dn)
    ident = ident + bd[None, :, None, None]
    return gdn + ident


# ---------------- deterministic parameter init ----------------
def _make_params(key):
    ks = jax.random.split(key, 8)
    w1 = jax.random.normal(ks[0], (3, 3, C_IN, C_OUT), jnp.float32) * 0.1   # HWIO
    b1 = jax.random.normal(ks[1], (C_OUT,), jnp.float32) * 0.01
    w2 = jax.random.normal(ks[2], (3, 3, C_OUT, C_OUT), jnp.float32) * 0.1  # HWIO
    b2 = jax.random.normal(ks[3], (C_OUT,), jnp.float32) * 0.01
    # GDN init (CompressAI-style, kept non-negative so beta + gamma@x^2 > 0); [co, ci]
    gamma = 0.1 * jnp.eye(C_OUT, dtype=jnp.float32) \
        + 0.01 * jnp.abs(jax.random.normal(ks[4], (C_OUT, C_OUT), jnp.float32))
    beta = jnp.ones((C_OUT,), jnp.float32)
    wd = jax.random.normal(ks[5], (C_IN, C_OUT), jnp.float32) * 0.1         # [ci, co]
    bd = jax.random.normal(ks[6], (C_OUT,), jnp.float32) * 0.01
    return (w1, b1, w2, b2, gamma, beta, wd, bd)


if __name__ == "__main__":
    key = jax.random.PRNGKey(0)
    kx, kp = jax.random.split(key)
    x = jax.random.normal(kx, (B, C_IN, H, W), jnp.float32)
    params = _make_params(kp)

    y = jax.block_until_ready(residual_block_with_stride(x, params))
    y_ref = jax.block_until_ready(_ref_forward(x, params))

    assert y.shape == (B, C_OUT, H_OUT, W_OUT), y.shape
    np.testing.assert_allclose(np.asarray(y), np.asarray(y_ref),
                               rtol=1e-5, atol=1e-5)
    print("KERNEL_OK")
</pallas_src>

<mosaic_0001>
module attributes {stable_mosaic.version = 11 : i64} {
  func.func @_resblock_kernel(%arg0: i32, %arg1: memref<40x128xf32, #tpu.memory_space<vmem>>, %arg2: memref<104x128xf32, #tpu.memory_space<vmem>>, %arg3: memref<8x128xf32, #tpu.memory_space<vmem>>) attributes {dimension_semantics = [#tpu.dimension_semantics<parallel>], iteration_bounds = array<i64: 1>, scalar_prefetch = 0 : i64, scratch_operands = 0 : i64, tpu.core_type = #tpu.core_type<tc>, window_params = [{pipeline_mode = #tpu.pipeline_mode<synchronous>, transform_indices = @transform_0, window_bounds = array<i64: 40, 128>}, {pipeline_mode = #tpu.pipeline_mode<synchronous>, transform_indices = @transform_1, window_bounds = array<i64: 104, 128>}, {pipeline_mode = #tpu.pipeline_mode<synchronous>, transform_indices = @transform_2, window_bounds = array<i64: 8, 128>}]} {
    %c0 = arith.constant 0 : index
    %c0_0 = arith.constant 0 : index
    %0 = vector.load %arg2[%c0, %c0_0] : memref<104x128xf32, #tpu.memory_space<vmem>>, vector<16x40xf32>
    %c0_1 = arith.constant 0 : index
    %c0_2 = arith.constant 0 : index
    %1 = vector.load %arg1[%c0_1, %c0_2] : memref<40x128xf32, #tpu.memory_space<vmem>>, vector<40x128xf32>
    %cst = arith.constant dense<0.000000e+00> : vector<16x128xf32>
    %2 = tpu.matmul %0, %1, %cst {dimension_numbers = #tpu.dot_dimension_numbers<[1], [0], [0], [1], [0, 0, 1, 1], [], []>} : vector<16x40xf32>, vector<40x128xf32>, vector<16x128xf32> -> vector<16x128xf32>
    %3 = vector.extract_strided_slice %2 {offsets = [0, 0], sizes = [8, 128], strides = [1, 1]} : vector<16x128xf32> to vector<8x128xf32>
    %4 = vector.extract_strided_slice %2 {offsets = [8, 0], sizes = [8, 128], strides = [1, 1]} : vector<16x128xf32> to vector<8x128xf32>
    %cst_3 = arith.constant 0.000000e+00 : f32
    %5 = vector.broadcast %cst_3 : f32 to vector<8x128xf32>
    %6 = arith.cmpf oge, %3, %5 : vector<8x128xf32>
    %cst_4 = arith.constant 0.00999999977 : f32
    %7 = vector.broadcast %cst_4 : f32 to vector<8x128xf32>
    %8 = arith.mulf %7, %3 : vector<8x128xf32>
    %9 = arith.select %6, %3, %8 : vector<8x128xi1>, vector<8x128xf32>
    %c32 = arith.constant 32 : index
    %c0_5 = arith.constant 0 : index
    %10 = vector.load %arg2[%c32, %c0_5] : memref<104x128xf32, #tpu.memory_space<vmem>>, vector<72x128xf32>
    %c64 = arith.constant 64 : index
    %c0_6 = arith.constant 0 : index
    %11 = vector.load %arg2[%c64, %c0_6] : memref<104x128xf32, #tpu.memory_space<vmem>>, vector<1x128xf32>
    %c9_i32 = arith.constant 9 : i32
    %12 = tpu.dynamic_rotate %9 by %c9_i32 dim 1 : vector<8x128xf32>, i32 -> vector<8x128xf32>
    %13 = vector.extract_strided_slice %10 {offsets = [0, 0], sizes = [8, 128], strides = [1, 1]} : vector<72x128xf32> to vector<8x128xf32>
    %14 = arith.mulf %12, %13 : vector<8x128xf32>
    %c8_i32 = arith.constant 8 : i32
    %15 = tpu.dynamic_rotate %9 by %c8_i32 dim 1 : vector<8x128xf32>, i32 -> vector<8x128xf32>
    %16 = vector.extract_strided_slice %10 {offsets = [8, 0], sizes = [8, 128], strides = [1, 1]} : vector<72x128xf32> to vector<8x128xf32>
    %17 = arith.mulf %15, %16 : vector<8x128xf32>
    %c7_i32 = arith.constant 7 : i32
    %18 = tpu.dynamic_rotate %9 by %c7_i32 dim 1 : vector<8x128xf32>, i32 -> vector<8x128xf32>
    %19 = vector.extract_strided_slice %10 {offsets = [16, 0], sizes = [8, 128], strides = [1, 1]} : vector<72x128xf32> to vector<8x128xf32>
    %20 = arith.mulf %18, %19 : vector<8x128xf32>
    %c1_i32 = arith.constant 1 : i32
    %21 = tpu.dynamic_rotate %9 by %c1_i32 dim 1 : vector<8x128xf32>, i32 -> vector<8x128xf32>
    %22 = vector.extract_strided_slice %10 {offsets = [24, 0], sizes = [8, 128], strides = [1, 1]} : vector<72x128xf32> to vector<8x128xf32>
    %23 = arith.mulf %21, %22 : vector<8x128xf32>
    %24 = vector.extract_strided_slice %10 {offsets = [32, 0], sizes = [8, 128], strides = [1, 1]} : vector<72x128xf32> to vector<8x128xf32>
    %25 = arith.mulf %9, %24 : vector<8x128xf32>
    %c127_i32 = arith.constant 127 : i32
    %26 = tpu.dynamic_rotate %9 by %c127_i32 dim 1 : vector<8x128xf32>, i32 -> vector<8x128xf32>
    %27 = vector.extract_strided_slice %10 {offsets = [40, 0], sizes = [8, 128], strides = [1, 1]} : vector<72x128xf32> to vector<8x128xf32>
    %28 = arith.mulf %26, %27 : vector<8x128xf32>
    %c121_i32 = arith.constant 121 : i32
    %29 = tpu.dynamic_rotate %9 by %c121_i32 dim 1 : vector<8x128xf32>, i32 -> vector<8x128xf32>
    %30 = vector.extract_strided_slice %10 {offsets = [48, 0], sizes = [8, 128], strides = [1, 1]} : vector<72x128xf32> to vector<8x128xf32>
    %31 = arith.mulf %29, %30 : vector<8x128xf32>
    %c120_i32 = arith.constant 120 : i32
    %32 = tpu.dynamic_rotate %9 by %c120_i32 dim 1 : vector<8x128xf32>, i32 -> vector<8x128xf32>
    %33 = vector.extract_strided_slice %10 {offsets = [56, 0], sizes = [8, 128], strides = [1, 1]} : vector<72x128xf32> to vector<8x128xf32>
    %34 = arith.mulf %32, %33 : vector<8x128xf32>
    %c119_i32 = arith.constant 119 : i32
    %35 = tpu.dynamic_rotate %9 by %c119_i32 dim 1 : vector<8x128xf32>, i32 -> vector<8x128xf32>
    %36 = vector.extract_strided_slice %10 {offsets = [64, 0], sizes = [8, 128], strides = [1, 1]} : vector<72x128xf32> to vector<8x128xf32>
    %37 = arith.mulf %35, %36 : vector<8x128xf32>
    %38 = tpu.concatenate %14, %17, %20, %23, %25, %28, %31, %34, %37, %11 in 0 : vector<8x128xf32>, vector<8x128xf32>, vector<8x128xf32>, vector<8x128xf32>, vector<8x128xf32>, vector<8x128xf32>, vector<8x128xf32>, vector<8x128xf32>, vector<8x128xf32>, vector<1x128xf32> -> vector<73x128xf32>
    %c16 = arith.constant 16 : index
    %c0_7 = arith.constant 0 : index
    %39 = vector.load %arg2[%c16, %c0_7] : memref<104x128xf32, #tpu.memory_space<vmem>>, vector<8x73xf32>
    %cst_8 = arith.constant dense<0.000000e+00> : vector<8x128xf32>
    %40 = tpu.matmul %39, %38, %cst_8 {dimension_numbers = #tpu.dot_dimension_numbers<[1], [0], [0], [1], [0, 0, 1, 1], [], []>} : vector<8x73xf32>, vector<73x128xf32>, vector<8x128xf32> -> vector<8x128xf32>
    %c24 = arith.constant 24 : index
    %c0_9 = arith.constant 0 : index
    %41 = vector.load %arg2[%c24, %c0_9] : memref<104x128xf32, #tpu.memory_space<vmem>>, vector<8x9xf32>
    %42 = arith.mulf %40, %40 : vector<8x128xf32>
    %43 = tpu.concatenate %42, %11 in 0 : vector<8x128xf32>, vector<1x128xf32> -> vector<9x128xf32>
    %cst_10 = arith.constant dense<0.000000e+00> : vector<8x128xf32>
    %44 = tpu.matmul %41, %43, %cst_10 {dimension_numbers = #tpu.dot_dimension_numbers<[1], [0], [0], [1], [0, 0, 1, 1], [], []>} : vector<8x9xf32>, vector<9x128xf32>, vector<8x128xf32> -> vector<8x128xf32>
    %45 = math.rsqrt %44 : vector<8x128xf32>
    %46 = arith.mulf %40, %45 : vector<8x128xf32>
    %47 = arith.addf %46, %4 : vector<8x128xf32>
    %c0_11 = arith.constant 0 : index
    %c0_12 = arith.constant 0 : index
    %48 = vector.load %arg3[%c0_11, %c0_12] : memref<8x128xf32, #tpu.memory_space<vmem>>, vector<8x128xf32>
    tpu.vector_store %arg3[%c0_11, %c0_12], %47 {strides = array<i32>} : memref<8x128xf32, #tpu.memory_space<vmem>>, vector<8x128xf32>,
    return
  }
  func.func @transform_0(%arg0: i32) -> (i32, i32) {
    %c0_i32 = arith.constant 0 : i32
    %c0_i32_0 = arith.constant 0 : i32
    %c0_i32_1 = arith.constant 0 : i32
    return %c0_i32, %c0_i32_0 : i32, i32
  }
  func.func @transform_1(%arg0: i32) -> (i32, i32) {
    %c0_i32 = arith.constant 0 : i32
    %c0_i32_0 = arith.constant 0 : i32
    %c0_i32_1 = arith.constant 0 : i32
    return %c0_i32, %c0_i32_0 : i32, i32
  }
  func.func @transform_2(%arg0: i32) -> (i32, i32) {
    %c0_i32 = arith.constant 0 : i32
    %c0_i32_0 = arith.constant 0 : i32
    %c0_i32_1 = arith.constant 0 : i32
    return %c0_i32, %c0_i32_0 : i32, i32
  }
}

</mosaic_0001>

<llo_original>
// kernel: residual_block_with_stride.1
$region0: #{residual_block_with_stride.1}
  #allocation0 [shape = 'u32[]', space=smem, size = 0x4, offset = 0x4, fixed_abs, tag = 'smem constant byte address 0x4 - core index']
  #allocation1 [shape = 'u32[144,128]{1,0:T(1,128)}', space=vmem, size = 0x12000, scoped, tag = 'internal scratch']
  %s0 = inlined_call_operand.vmem [shape: f32[40,128], index: 0, kind: input, shape index: {}]
  %s1 = inlined_call_operand.vmem [shape: f32[104,128], index: 1, kind: input, shape index: {}]
  %s2 = inlined_call_operand.vmem [shape: f32[8,128], index: 2, kind: output, shape index: {}]
  %s3 = sld [smem:[#allocation0]]
  $region18: #{residual_block_with_stride.1} parent=0
    _
  %s5 = ssub.s32 1, %s3
  %s6 = scalar_select 0, %s5, %s3
  // Predicated region
  $region2: #{residual_block_with_stride.1} parent=0 // pred_check
    _
  $region3: #{residual_block_with_stride.1} parent=0 // pred_check_branch
    %8 = sbr.rel (0) target = $region5
  $region4: #{residual_block_with_stride.1} parent=0 // pred_region
    _
  $region5: #{residual_block_with_stride.1} parent=0 // pred_fallthru
    _
  // Predicated region
  $region6: #{residual_block_with_stride.1} parent=0 // pred_check
    _
  $region7: #{residual_block_with_stride.1} parent=0 // pred_check_branch
    %10 = sbr.rel (0) target = $region9
  $region8: #{residual_block_with_stride.1} parent=0 // pred_region
    _
  $region9: #{residual_block_with_stride.1} parent=0 // pred_fallthru
    _
  %v11 = vld [vmem:[%s1] sm:$0xff]
  %v12 = vld [vmem:[%s1 + $0x8] sm:$0xff]
  %v13 = vld [vmem:[%s0] sm:$0xff]
  %v14 = vld [vmem:[%s0 + $0x8] sm:$0xff]
  %v15 = vld [vmem:[%s0 + $0x10] sm:$0xff]
  %v16 = vld [vmem:[%s0 + $0x18] sm:$0xff]
  %v17 = vld [vmem:[%s0 + $0x20] sm:$0xff]
  %vm18 = vcmask 326656
  %v20 = vsel %vm18, %v11, 0
  %v23 = vsel %vm18, %v12, 0
  %25 = vmatprep.subr.mxu0 0.0
  %26 = vmatpush1.msra.mxu0 0.0
  %27 = vmatprep.subr.mxu0 0.0
  %28 = vmatpush1.msra.mxu0 0.0
  %29 = vmatprep.subr.mxu0 0.0
  %30 = vmatpush1.msra.mxu0 0.0
  %31 = vmatprep.subr.mxu0 0.0
  %32 = vmatpush1.msra.mxu0 0.0
  %33 = vmatprep.subr.mxu0 0.0
  %34 = vmatpush1.msra.mxu0 0.0
  %35 = vmatprep.subr.mxu0 0.0
  %36 = vmatpush1.msra.mxu0 0.0
  %37 = vmatprep.subr.mxu0 0.0
  %38 = vmatpush1.msra.mxu0 0.0
  %39 = vmatprep.subr.mxu0 0.0
  %40 = vmatpush1.msra.mxu0 0.0
  %41 = vmatprep.subr.mxu0 0.0
  %42 = vmatpush1.msra.mxu0 0.0
  %43 = vmatprep.subr.mxu0 0.0
  %44 = vmatpush1.msra.mxu0 0.0
  %45 = vmatprep.subr.mxu0 0.0
  %46 = vmatpush1.msra.mxu0 0.0
  %47 = vmatprep.subr.mxu0 0.0
  %48 = vmatpush1.msra.mxu0 %v17
  %49 = vmatprep.subr.mxu0 0.0
  %50 = vmatpush1.msra.mxu0 %v16
  %51 = vmatprep.subr.mxu0 0.0
  %52 = vmatpush1.msra.mxu0 %v15
  %53 = vmatprep.subr.mxu0 0.0
  %54 = vmatpush1.msra.mxu0 %v14
  %55 = vmatprep.subr.mxu0 0.0
  %56 = vmatpush1.msra.mxu0 %v13
  %57 = vmatprep.subr.mxu0 0.0
  %58 = vmatpush2.msra.mxu0 0.0
  %59 = vmatprep.subr.mxu0 0.0
  %60 = vmatpush2.msra.mxu0 0.0
  %61 = vmatprep.subr.mxu0 0.0
  %62 = vmatpush2.msra.mxu0 0.0
  %63 = vmatprep.subr.mxu0 0.0
  %64 = vmatpush2.msra.mxu0 0.0
  %65 = vmatprep.subr.mxu0 0.0
  %66 = vmatpush2.msra.mxu0 0.0
  %67 = vmatprep.subr.mxu0 0.0
  %68 = vmatpush2.msra.mxu0 0.0
  %69 = vmatprep.subr.mxu0 0.0
  %70 = vmatpush2.msra.mxu0 0.0
  %71 = vmatprep.subr.mxu0 0.0
  %72 = vmatpush2.msra.mxu0 0.0
  %73 = vmatprep.subr.mxu0 0.0
  %74 = vmatpush2.msra.mxu0 0.0
  %75 = vmatprep.subr.mxu0 0.0
  %76 = vmatpush2.msra.mxu0 0.0
  %77 = vmatprep.subr.mxu0 0.0
  %78 = vmatpush2.msra.mxu0 0.0
  %79 = vmatprep.subr.mxu0 0.0
  %80 = vmatpush2.msra.mxu0 0.0
  %81 = vmatprep.subr.mxu0 0.0
  %82 = vmatpush2.msra.mxu0 0.0
  %83 = vmatprep.subr.mxu0 0.0
  %84 = vmatpush2.msra.mxu0 0.0
  %85 = vmatprep.subr.mxu0 0.0
  %86 = vmatpush2.msra.mxu0 0.0
  %87 = vmatprep.subr.mxu0 0.0
  %88 = vmatpush2.msra.mxu0 0.0
  %89 = vmatprep.mubr.f32.mxu0 0.0
  %90 = vmatmul.mubr.f32.gmra.mxu0 %v20
  %v91 = vpop.f32.mrf.mxu0
  %v92 = vadd.f32 0.0, %v91
  %v93 = vpop.f32.mrf.mxu0
  %94 = vmatprep.mubr.f32.mxu0 0.0
  %95 = vmatmul.mubr.f32.gmra.mxu0 %v23
  %v96 = vpop.f32.mrf.mxu0
  %v97 = vadd.f32 0.0, %v96
  %v98 = vpop.f32.mrf.mxu0
  %99 = vdwg.mxu0
  %vm100 = vcmp.ge.f32.partialorder %v92, 0.0
  %v101 = vmul.f32 %v92, 0.01
  %v102 = vsel %vm100, %v92, %v101
  %v103 = vld [vmem:[%s1 + $0x20] sm:$0xff]
  %v104 = vld [vmem:[%s1 + $0x28] sm:$0xff]
  %v105 = vld [vmem:[%s1 + $0x30] sm:$0xff]
  %v106 = vld [vmem:[%s1 + $0x38] sm:$0xff]
  %v107 = vld [vmem:[%s1 + $0x40] sm:$0xff]
  %v108 = vld [vmem:[%s1 + $0x48] sm:$0xff]
  %v109 = vld [vmem:[%s1 + $0x50] sm:$0xff]
  %v110 = vld [vmem:[%s1 + $0x58] sm:$0xff]
  %v111 = vld [vmem:[%s1 + $0x60] sm:$0xff]
  %v112 = vld [vmem:[%s1 + $0x40] sm:$0x1]
  %113 = vrot.lane.b32.xlu0 %v102, 9
  %v114 = vpop.permute.xlu0 %113
  %v115 = vmul.f32 %v114, %v103
  %116 = vrot.lane.b32.xlu0 %v102, 8
  %v117 = vpop.permute.xlu0 %116
  %v118 = vmul.f32 %v117, %v104
  %119 = vrot.lane.b32.xlu0 %v102, 7
  %v120 = vpop.permute.xlu0 %119
  %v121 = vmul.f32 %v120, %v105
  %122 = vrot.lane.b32.xlu0 %v102, 1
  %v123 = vpop.permute.xlu0 %122
  %v124 = vmul.f32 %v123, %v106
  %v125 = vmul.f32 %v102, %v107
  %126 = vrot.lane.b32.xlu0 %v102, 127
  %v127 = vpop.permute.xlu0 %126
  %v128 = vmul.f32 %v127, %v108
  %129 = vrot.lane.b32.xlu0 %v102, 121
  %v130 = vpop.permute.xlu0 %129
  %v131 = vmul.f32 %v130, %v109
  %132 = vrot.lane.b32.xlu0 %v102, 120
  %v133 = vpop.permute.xlu0 %132
  %v134 = vmul.f32 %v133, %v110
  %135 = vrot.lane.b32.xlu0 %v102, 119
  %v136 = vpop.permute.xlu0 %135
  %v137 = vmul.f32 %v136, %v111
  %v138 = vld [vmem:[%s1 + $0x10] sm:$0xff]
  %vm139 = vcmask 596992
  %v141 = vsel %vm139, %v138, 0
  %vm143 = vcmask 1040384
  %v145 = vsel %vm143, %v112, 0
  %147 = vmatprep.subr.mxu0 0.0
  %148 = vmatpush1.msra.mxu0 0.0
  %149 = vmatprep.subr.mxu0 0.0
  %150 = vmatpush1.msra.mxu0 0.0
  %151 = vmatprep.subr.mxu0 0.0
  %152 = vmatpush1.msra.mxu0 0.0
  %153 = vmatprep.subr.mxu0 0.0
  %154 = vmatpush1.msra.mxu0 0.0
  %155 = vmatprep.subr.mxu0 0.0
  %156 = vmatpush1.msra.mxu0 0.0
  %157 = vmatprep.subr.mxu0 0.0
  %158 = vmatpush1.msra.mxu0 0.0
  %159 = vmatprep.subr.mxu0 0.0
  %160 = vmatpush1.msra.mxu0 %v145
  %161 = vmatprep.subr.mxu0 0.0
  %162 = vmatpush1.msra.mxu0 %v137
  %163 = vmatprep.subr.mxu0 0.0
  %164 = vmatpush1.msra.mxu0 %v134
  %165 = vmatprep.subr.mxu0 0.0
  %166 = vmatpush1.msra.mxu0 %v131
  %167 = vmatprep.subr.mxu0 0.0
  %168 = vmatpush1.msra.mxu0 %v128
  %169 = vmatprep.subr.mxu0 0.0
  %170 = vmatpush1.msra.mxu0 %v125
  %171 = vmatprep.subr.mxu0 0.0
  %172 = vmatpush1.msra.mxu0 %v124
  %173 = vmatprep.subr.mxu0 0.0
  %174 = vmatpush1.msra.mxu0 %v121
  %175 = vmatprep.subr.mxu0 0.0
  %176 = vmatpush1.msra.mxu0 %v118
  %177 = vmatprep.subr.mxu0 0.0
  %178 = vmatpush1.msra.mxu0 %v115
  %179 = vmatprep.subr.mxu0 0.0
  %180 = vmatpush2.msra.mxu0 0.0
  %181 = vmatprep.subr.mxu0 0.0
  %182 = vmatpush2.msra.mxu0 0.0
  %183 = vmatprep.subr.mxu0 0.0
  %184 = vmatpush2.msra.mxu0 0.0
  %185 = vmatprep.subr.mxu0 0.0
  %186 = vmatpush2.msra.mxu0 0.0
  %187 = vmatprep.subr.mxu0 0.0
  %188 = vmatpush2.msra.mxu0 0.0
  %189 = vmatprep.subr.mxu0 0.0
  %190 = vmatpush2.msra.mxu0 0.0
  %191 = vmatprep.subr.mxu0 0.0
  %192 = vmatpush2.msra.mxu0 0.0
  %193 = vmatprep.subr.mxu0 0.0
  %194 = vmatpush2.msra.mxu0 0.0
  %195 = vmatprep.subr.mxu0 0.0
  %196 = vmatpush2.msra.mxu0 0.0
  %197 = vmatprep.subr.mxu0 0.0
  %198 = vmatpush2.msra.mxu0 0.0
  %199 = vmatprep.subr.mxu0 0.0
  %200 = vmatpush2.msra.mxu0 0.0
  %201 = vmatprep.subr.mxu0 0.0
  %202 = vmatpush2.msra.mxu0 0.0
  %203 = vmatprep.subr.mxu0 0.0
  %204 = vmatpush2.msra.mxu0 0.0
  %205 = vmatprep.subr.mxu0 0.0
  %206 = vmatpush2.msra.mxu0 0.0
  %207 = vmatprep.subr.mxu0 0.0
  %208 = vmatpush2.msra.mxu0 0.0
  %209 = vmatprep.subr.mxu0 0.0
  %210 = vmatpush2.msra.mxu0 0.0
  %211 = vmatprep.mubr.f32.mxu0 0.0
  %212 = vmatmul.mubr.f32.gmra.mxu0 %v141
  %v213 = vpop.f32.mrf.mxu0
  %v214 = vadd.f32 0.0, %v213
  %v215 = vpop.f32.mrf.mxu0
  %216 = vdwg.mxu0
  %v217 = vld [vmem:[%s1 + $0x18] sm:$0xff]
  %v218 = vmul.f32 %v214, %v214
  %vm219 = vcmask 72704
  %v221 = vsel %vm219, %v217, 0
  %223 = vmatprep.subr.mxu0 0.0
  %224 = vmatpush1.msra.mxu0 0.0
  %225 = vmatprep.subr.mxu0 0.0
  %226 = vmatpush1.msra.mxu0 0.0
  %227 = vmatprep.subr.mxu0 0.0
  %228 = vmatpush1.msra.mxu0 0.0
  %229 = vmatprep.subr.mxu0 0.0
  %230 = vmatpush1.msra.mxu0 0.0
  %231 = vmatprep.subr.mxu0 0.0
  %232 = vmatpush1.msra.mxu0 0.0
  %233 = vmatprep.subr.mxu0 0.0
  %234 = vmatpush1.msra.mxu0 0.0
  %235 = vmatprep.subr.mxu0 0.0
  %236 = vmatpush1.msra.mxu0 0.0
  %237 = vmatprep.subr.mxu0 0.0
  %238 = vmatpush1.msra.mxu0 0.0
  %239 = vmatprep.subr.mxu0 0.0
  %240 = vmatpush1.msra.mxu0 0.0
  %241 = vmatprep.subr.mxu0 0.0
  %242 = vmatpush1.msra.mxu0 0.0
  %243 = vmatprep.subr.mxu0 0.0
  %244 = vmatpush1.msra.mxu0 0.0
  %245 = vmatprep.subr.mxu0 0.0
  %246 = vmatpush1.msra.mxu0 0.0
  %247 = vmatprep.subr.mxu0 0.0
  %248 = vmatpush1.msra.mxu0 0.0
  %249 = vmatprep.subr.mxu0 0.0
  %250 = vmatpush1.msra.mxu0 0.0
  %251 = vmatprep.subr.mxu0 0.0
  %252 = vmatpush1.msra.mxu0 %v145
  %253 = vmatprep.subr.mxu0 0.0
  %254 = vmatpush1.msra.mxu0 %v218
  %255 = vmatprep.subr.mxu0 0.0
  %256 = vmatpush2.msra.mxu0 0.0
  %257 = vmatprep.subr.mxu0 0.0
  %258 = vmatpush2.msra.mxu0 0.0
  %259 = vmatprep.subr.mxu0 0.0
  %260 = vmatpush2.msra.mxu0 0.0
  %261 = vmatprep.subr.mxu0 0.0
  %262 = vmatpush2.msra.mxu0 0.0
  %263 = vmatprep.subr.mxu0 0.0
  %264 = vmatpush2.msra.mxu0 0.0
  %265 = vmatprep.subr.mxu0 0.0
  %266 = vmatpush2.msra.mxu0 0.0
  %267 = vmatprep.subr.mxu0 0.0
  %268 = vmatpush2.msra.mxu0 0.0
  %269 = vmatprep.subr.mxu0 0.0
  %270 = vmatpush2.msra.mxu0 0.0
  %271 = vmatprep.subr.mxu0 0.0
  %272 = vmatpush2.msra.mxu0 0.0
  %273 = vmatprep.subr.mxu0 0.0
  %274 = vmatpush2.msra.mxu0 0.0
  %275 = vmatprep.subr.mxu0 0.0
  %276 = vmatpush2.msra.mxu0 0.0
  %277 = vmatprep.subr.mxu0 0.0
  %278 = vmatpush2.msra.mxu0 0.0
  %279 = vmatprep.subr.mxu0 0.0
  %280 = vmatpush2.msra.mxu0 0.0
  %281 = vmatprep.subr.mxu0 0.0
  %282 = vmatpush2.msra.mxu0 0.0
  %283 = vmatprep.subr.mxu0 0.0
  %284 = vmatpush2.msra.mxu0 0.0
  %285 = vmatprep.subr.mxu0 0.0
  %286 = vmatpush2.msra.mxu0 0.0
  %287 = vmatprep.mubr.f32.mxu0 0.0
  %288 = vmatmul.mubr.f32.gmra.mxu0 %v221
  %v289 = vpop.f32.mrf.mxu0
  %v290 = vadd.f32 0.0, %v289
  %v291 = vpop.f32.mrf.mxu0
  %292 = vdwg.mxu0
  %v293 = vrsqrt.pop %v290
  %v294 = vmul.f32 %v214, %v293
  %v295 = vadd.f32 %v294, %v97
  %296 = vst [vmem:[%s2] sm:$0xff] %v295
  // Predicated region
  $region10: #{residual_block_with_stride.1} parent=0 // pred_check
    _
  $region11: #{residual_block_with_stride.1} parent=0 // pred_check_branch
    %298 = sbr.rel (0) target = $region13
  $region12: #{residual_block_with_stride.1} parent=0 // pred_region
    _
  $region13: #{residual_block_with_stride.1} parent=0 // pred_fallthru
    _
  // Predicated region
  $region14: #{residual_block_with_stride.1} parent=0 // pred_check
    _
  $region15: #{residual_block_with_stride.1} parent=0 // pred_check_branch
    %300 = sbr.rel (0) target = $region17
  $region16: #{residual_block_with_stride.1} parent=0 // pred_region
    _
  $region17: #{residual_block_with_stride.1} parent=0 // pred_fallthru
    _

</llo_original>
